<compile_context>
chip_gen: v7x
topology: tpu7x:2x2x1
jax: 0.10.0
libtpu: 0.0.40
codegen_flags: <defaults>
</compile_context>

<pallas_src>
import functools

import jax
import jax.numpy as jnp
from jax.experimental import pallas as pl
from jax.experimental.pallas import tpu as pltpu


def _round_up(v, m):
    return ((v + m - 1) // m) * m


def _vmem_capacity_bytes():
    # Trace-time hardware query; 64 MiB on v7x, 128 MiB on v5e/v6e.
    try:
        return int(getattr(pltpu.get_tpu_info(), "vmem_capacity_bytes",
                           128 * 1024 * 1024))
    except Exception:
        return 128 * 1024 * 1024


def conv1x1_bn_relu6_kernel(x_ref, w_ref, b_ref, o_ref):
    # x_ref: (bN, Cin, ts)   activations (bf16 or f32), spatial on lanes
    # w_ref: (Cout, Cin)     BN-scale-folded weight (resident; constant index map)
    # b_ref: (Cout, 1)       folded BN bias (f32)
    # o_ref: (bN, Cout, ts)
    w = w_ref[...]
    b = b_ref[...]
    for i in range(x_ref.shape[0]):      # bN is small & static
        y = jnp.dot(w, x_ref[i], preferred_element_type=jnp.float32)
        o_ref[i] = jnp.clip(y + b, 0.0, 6.0).astype(o_ref.dtype)  # ReLU6


@functools.partial(jax.jit, static_argnames=("ts_cap", "use_bf16"))
def conv1_1_block(x, weight, gamma, beta, running_mean, running_var,
                  eps=1e-5, ts_cap=4096, use_bf16=True):
    """x: (N, Cin, H, W); weight: (Cout, Cin) (1x1 conv kernel, squeezed)."""
    N, Cin, H, W = x.shape
    Cout = weight.shape[0]
    HW = H * W

    out_dtype = x.dtype
    in_dtype = jnp.bfloat16 if use_bf16 else x.dtype

    # ---- Fold BatchNorm (eval mode) into weight scale + per-channel bias ----
    scale = gamma / jnp.sqrt(running_var + eps)              # (Cout,)
    bias = beta - running_mean * scale                       # (Cout,)
    w_fold = (weight * scale[:, None]).astype(in_dtype)      # (Cout, Cin)
    bias2 = bias[:, None].astype(jnp.float32)                # (Cout, 1)

    # NCHW -> (N, Cin, H*W): contiguous (free) reshape, no data movement.
    x3 = x.reshape(N, Cin, HW).astype(in_dtype)

    # ---- VMEM-budget-aware tile selection -----------------------------------
    in_bytes = jnp.dtype(in_dtype).itemsize
    out_bytes = jnp.dtype(out_dtype).itemsize
    sub_in = 8 * (4 // in_bytes)          # sublane multiple: 8 (f32) / 16 (bf16)
    sub_out = 8 * (4 // out_bytes)
    cin_pad = _round_up(Cin, sub_in)      # account for sublane padding in VMEM
    cout_pad = _round_up(Cout, sub_out)
    col_bytes = cin_pad * in_bytes + cout_pad * out_bytes   # x + out, per column/image

    vmem_cap = _vmem_capacity_bytes()
    vmem_budget = int(vmem_cap * 0.70)    # headroom for weights / compiler scratch
    vmem_limit = int(vmem_cap * 0.85)

    # Largest spatial tile (multiple of 128) that still double-buffers x + out.
    ts_budget = max(128, (vmem_budget // (2 * col_bytes)) // 128 * 128)
    ts_cap_eff = min(ts_cap, ts_budget)

    if HW <= ts_cap_eff:
        ts, n_s = HW, 1                   # full-extent spatial block (always legal)
    else:
        n_s = pl.cdiv(HW, ts_cap_eff)
        ts = min(ts_cap_eff, _round_up(pl.cdiv(HW, n_s), 128))   # balanced tiles
        n_s = pl.cdiv(HW, ts)

    # Fold a batch block into each step so each step moves >= ~1 MiB when possible.
    per_step_target = 1 << 20
    if n_s == 1:
        bn_budget = max(1, vmem_budget // (2 * ts * col_bytes))
        bn_target = max(1, pl.cdiv(per_step_target, ts * col_bytes))
        bN = int(min(N, bn_budget, bn_target))
    else:
        bN = 1
    n_b = pl.cdiv(N, bN)

    # If one fat step holds enough bytes to be worth sharing, split it so v7x's
    # second TensorCore gets work (no-op for tiny problems and on v5e/v6e).
    if n_b * n_s == 1 and N * HW * col_bytes > (4 << 20):
        if N >= 2:
            bN = max(1, bN // 2)
            n_b = pl.cdiv(N, bN)
        else:
            ts = _round_up(pl.cdiv(HW, 2), 128)
            n_s = pl.cdiv(HW, ts)

    out3 = pl.pallas_call(
        conv1x1_bn_relu6_kernel,
        out_shape=jax.ShapeDtypeStruct((N, Cout, HW), out_dtype),
        grid_spec=pltpu.PrefetchScalarGridSpec(
            num_scalar_prefetch=0,
            grid=(n_b, n_s),
            in_specs=[
                pl.BlockSpec((bN, Cin, ts), lambda b, s: (b, 0, s)),
                pl.BlockSpec((Cout, Cin), lambda b, s: (0, 0)),
                pl.BlockSpec((Cout, 1), lambda b, s: (0, 0)),
            ],
            out_specs=pl.BlockSpec((bN, Cout, ts), lambda b, s: (b, 0, s)),
        ),
        compiler_params=pltpu.CompilerParams(
            dimension_semantics=("parallel", "parallel"),
            vmem_limit_bytes=vmem_limit,
        ),
    )(x3, w_fold, bias2)

    # (N, Cout, H*W) -> NCHW: contiguous reshape, free.
    return out3.reshape(N, Cout, H, W)


if __name__ == "__main__":
    key = jax.random.PRNGKey(0)
    k_x, k_w = jax.random.split(key)

    # Small shapes consistent with the module: batch=2, in_ch=4, block_ch=8, 16x16.
    N, in_ch, H, W = 2, 4, 16, 16
    block_ch = 8

    x = jax.random.normal(k_x, (N, in_ch, H, W), dtype=jnp.float32)

    # Deterministic parameter init (Kaiming-like scale for the 1x1 conv weight).
    fan_in = in_ch * 1 * 1
    weight = jax.random.normal(k_w, (block_ch, in_ch), dtype=jnp.float32) * (2.0 / fan_in) ** 0.5

    # BatchNorm2d default init / running stats (eval-mode semantics).
    gamma = jnp.ones((block_ch,), jnp.float32)
    beta = jnp.zeros((block_ch,), jnp.float32)
    running_mean = jnp.zeros((block_ch,), jnp.float32)
    running_var = jnp.ones((block_ch,), jnp.float32)

    # Plain-JAX reference (f32).
    ref = jnp.einsum("nchw,oc->nohw", x, weight)
    scale = gamma / jnp.sqrt(running_var + 1e-5)
    bias = beta - running_mean * scale
    ref = jnp.clip(ref * scale[None, :, None, None] + bias[None, :, None, None], 0.0, 6.0)

    # Exact-precision path (f32 I/O) — tight tolerance.
    out_f32 = jax.block_until_ready(
        conv1_1_block(x, weight, gamma, beta, running_mean, running_var, use_bf16=False))
    assert out_f32.shape == (N, block_ch, H, W)
    assert jnp.max(jnp.abs(out_f32 - ref)) < 1e-4

    # Default fast path (bf16 activations/weights, f32 accumulate + f32 output).
    out = jax.block_until_ready(
        conv1_1_block(x, weight, gamma, beta, running_mean, running_var))
    assert out.shape == (N, block_ch, H, W)
    assert jnp.max(jnp.abs(out - ref)) < 5e-2

    print("KERNEL_OK")
</pallas_src>

<mosaic_0001>
module attributes {stable_mosaic.version = 11 : i64} {
  func.func @conv1x1_bn_relu6_kernel(%arg0: i32, %arg1: i32, %arg2: memref<2x4x256xf32, #tpu.memory_space<vmem>>, %arg3: memref<8x4xf32, #tpu.memory_space<vmem>>, %arg4: memref<8x1xf32, #tpu.memory_space<vmem>>, %arg5: memref<2x8x256xf32, #tpu.memory_space<vmem>>) attributes {dimension_semantics = [#tpu.dimension_semantics<parallel>, #tpu.dimension_semantics<parallel>], iteration_bounds = array<i64: 1, 1>, scalar_prefetch = 0 : i64, scratch_operands = 0 : i64, tpu.core_type = #tpu.core_type<tc>, window_params = [{transform_indices = @transform_0, window_bounds = array<i64: 2, 4, 256>}, {pipeline_mode = #tpu.pipeline_mode<synchronous>, transform_indices = @transform_1, window_bounds = array<i64: 8, 4>}, {pipeline_mode = #tpu.pipeline_mode<synchronous>, transform_indices = @transform_2, window_bounds = array<i64: 8, 1>}, {transform_indices = @transform_3, window_bounds = array<i64: 2, 8, 256>}]} {
    %c0 = arith.constant 0 : index
    %c0_0 = arith.constant 0 : index
    %0 = vector.load %arg3[%c0, %c0_0] : memref<8x4xf32, #tpu.memory_space<vmem>>, vector<8x4xf32>
    %c0_1 = arith.constant 0 : index
    %c0_2 = arith.constant 0 : index
    %1 = vector.load %arg4[%c0_1, %c0_2] : memref<8x1xf32, #tpu.memory_space<vmem>>, vector<8x1xf32>
    %c0_3 = arith.constant 0 : index
    %c0_4 = arith.constant 0 : index
    %c0_5 = arith.constant 0 : index
    %2 = vector.load %arg2[%c0_3, %c0_4, %c0_5] : memref<2x4x256xf32, #tpu.memory_space<vmem>>, vector<1x4x256xf32>
    %3 = vector.shape_cast %2 : vector<1x4x256xf32> to vector<4x256xf32>
    %cst = arith.constant dense<0.000000e+00> : vector<8x256xf32>
    %4 = tpu.matmul %0, %3, %cst {dimension_numbers = #tpu.dot_dimension_numbers<[1], [0], [0], [1], [0, 0, 1, 1], [], []>} : vector<8x4xf32>, vector<4x256xf32>, vector<8x256xf32> -> vector<8x256xf32>
    %5 = vector.broadcast %1 : vector<8x1xf32> to vector<8x256xf32>
    %6 = arith.addf %4, %5 : vector<8x256xf32>
    %cst_6 = arith.constant 0.000000e+00 : f32
    %cst_7 = arith.constant 6.000000e+00 : f32
    %7 = vector.broadcast %cst_6 : f32 to vector<8x256xf32>
    %8 = arith.maximumf %7, %6 : vector<8x256xf32>
    %9 = vector.broadcast %cst_7 : f32 to vector<8x256xf32>
    %10 = arith.minimumf %9, %8 : vector<8x256xf32>
    %c0_8 = arith.constant 0 : index
    %c0_9 = arith.constant 0 : index
    %c0_10 = arith.constant 0 : index
    %11 = vector.load %arg5[%c0_8, %c0_9, %c0_10] : memref<2x8x256xf32, #tpu.memory_space<vmem>>, vector<1x8x256xf32>
    %12 = vector.shape_cast %11 : vector<1x8x256xf32> to vector<8x256xf32>
    %13 = vector.shape_cast %10 : vector<8x256xf32> to vector<1x8x256xf32>
    tpu.vector_store %arg5[%c0_8, %c0_9, %c0_10], %13 {strides = array<i32>} : memref<2x8x256xf32, #tpu.memory_space<vmem>>, vector<1x8x256xf32>,
    %c1 = arith.constant 1 : index
    %c0_11 = arith.constant 0 : index
    %c0_12 = arith.constant 0 : index
    %14 = vector.load %arg2[%c1, %c0_11, %c0_12] : memref<2x4x256xf32, #tpu.memory_space<vmem>>, vector<1x4x256xf32>
    %15 = vector.shape_cast %14 : vector<1x4x256xf32> to vector<4x256xf32>
    %cst_13 = arith.constant dense<0.000000e+00> : vector<8x256xf32>
    %16 = tpu.matmul %0, %15, %cst_13 {dimension_numbers = #tpu.dot_dimension_numbers<[1], [0], [0], [1], [0, 0, 1, 1], [], []>} : vector<8x4xf32>, vector<4x256xf32>, vector<8x256xf32> -> vector<8x256xf32>
    %17 = vector.broadcast %1 : vector<8x1xf32> to vector<8x256xf32>
    %18 = arith.addf %16, %17 : vector<8x256xf32>
    %cst_14 = arith.constant 0.000000e+00 : f32
    %cst_15 = arith.constant 6.000000e+00 : f32
    %19 = vector.broadcast %cst_14 : f32 to vector<8x256xf32>
    %20 = arith.maximumf %19, %18 : vector<8x256xf32>
    %21 = vector.broadcast %cst_15 : f32 to vector<8x256xf32>
    %22 = arith.minimumf %21, %20 : vector<8x256xf32>
    %c1_16 = arith.constant 1 : index
    %c0_17 = arith.constant 0 : index
    %c0_18 = arith.constant 0 : index
    %23 = vector.load %arg5[%c1_16, %c0_17, %c0_18] : memref<2x8x256xf32, #tpu.memory_space<vmem>>, vector<1x8x256xf32>
    %24 = vector.shape_cast %23 : vector<1x8x256xf32> to vector<8x256xf32>
    %25 = vector.shape_cast %22 : vector<8x256xf32> to vector<1x8x256xf32>
    tpu.vector_store %arg5[%c1_16, %c0_17, %c0_18], %25 {strides = array<i32>} : memref<2x8x256xf32, #tpu.memory_space<vmem>>, vector<1x8x256xf32>,
    return
  }
  func.func @transform_0(%arg0: i32, %arg1: i32) -> (i32, i32, i32) {
    %c0_i32 = arith.constant 0 : i32
    %c0_i32_0 = arith.constant 0 : i32
    return %arg0, %c0_i32, %arg1 : i32, i32, i32
  }
  func.func @transform_1(%arg0: i32, %arg1: i32) -> (i32, i32) {
    %c0_i32 = arith.constant 0 : i32
    %c0_i32_0 = arith.constant 0 : i32
    %c0_i32_1 = arith.constant 0 : i32
    return %c0_i32, %c0_i32_0 : i32, i32
  }
  func.func @transform_2(%arg0: i32, %arg1: i32) -> (i32, i32) {
    %c0_i32 = arith.constant 0 : i32
    %c0_i32_0 = arith.constant 0 : i32
    %c0_i32_1 = arith.constant 0 : i32
    return %c0_i32, %c0_i32_0 : i32, i32
  }
  func.func @transform_3(%arg0: i32, %arg1: i32) -> (i32, i32, i32) {
    %c0_i32 = arith.constant 0 : i32
    %c0_i32_0 = arith.constant 0 : i32
    return %arg0, %c0_i32, %arg1 : i32, i32, i32
  }
}

</mosaic_0001>

<llo_original>
// kernel: conv1_1_block.1
$region0: #{conv1_1_block.1}
  #allocation0 [shape = 'u32[]', space=smem, size = 0x4, offset = 0x4, fixed_abs, tag = 'smem constant byte address 0x4 - core index']
  #allocation1 [shape = 'u32[144,128]{1,0:T(1,128)}', space=vmem, size = 0x12000, scoped, tag = 'internal scratch']
  %s0 = inlined_call_operand.hbm [shape: f32[2,4,256], index: 0, kind: input, shape index: {}]
  %s1 = inlined_call_operand.hbm [shape: f32[8,4], index: 1, kind: input, shape index: {}]
  %s2 = inlined_call_operand.hbm [shape: f32[8,1], index: 2, kind: input, shape index: {}]
  %s3 = inlined_call_operand.hbm [shape: f32[2,8,256], index: 3, kind: output, shape index: {}]
  %s4 = sld [smem:[#allocation0]]
  $region34: #{conv1_1_block.1} parent=0
    _
  %s6 = ssub.s32 1, %s4
  %s7 = scalar_select 0, %s6, %s4
  $region1: #{conv1_1_block.1} parent=0
    #allocation2 [shape = 'u8[8192]{0}', space=vmem, size = 0x2000, scoped, tag = 'input window, operand 0, single buffered']
    #allocation3 [shape = 's32[1]{0}', space=sflag, size = 0x4, scoped, tag = 'scoped memory for conv1_1_block.1']
    #allocation4 [shape = 's32[1]{0}', space=sflag, size = 0x4, scoped, tag = 'scoped memory for conv1_1_block.1']
    #allocation5 [shape = 'u8[4096]{0}', space=vmem, size = 0x1000, scoped, tag = 'input window, operand 1, single buffered']
    #allocation6 [shape = 's32[1]{0}', space=sflag, size = 0x4, scoped, tag = 'scoped memory for conv1_1_block.1']
    #allocation7 [shape = 'u8[4096]{0}', space=vmem, size = 0x1000, scoped, tag = 'input window, operand 2, single buffered']
    #allocation8 [shape = 'u8[16384]{0}', space=vmem, size = 0x4000, scoped, tag = 'output window, operand 0, single buffered']
    %8 = vsyncpa [#allocation3], 0
    %9 = vsyncpa [#allocation6], 0
    %10 = vsyncpa [#allocation4], 0
    // Predicated region
    $region2: #{conv1_1_block.1} parent=1 // pred_check
      _
    $region3: #{conv1_1_block.1} parent=1 // pred_check_branch
      %12 = sbr.rel (0) target = $region5
    $region4: #{conv1_1_block.1} parent=1 // pred_region
      %s14 = ssub.s32 256, 256
      %15 = vsyncadd [#allocation3], %s14
      %s16 = sshll.u32 [#allocation2], 4
      %s17 = int_to_ptr.vmem [resolvable:$true] %s16
      %22 = dma.hbm_to_vmem [thread:$0]  %s0, 256, %s17, [#allocation3], 128, 128, 8
    $region5: #{conv1_1_block.1} parent=1 // pred_fallthru
      _
    // Predicated region
    $region6: #{conv1_1_block.1} parent=1 // pred_check
      _
    $region7: #{conv1_1_block.1} parent=1 // pred_check_branch
      %24 = sbr.rel (0) target = $region9
    $region8: #{conv1_1_block.1} parent=1 // pred_region
      %s26 = ssub.s32 128, 128
      %27 = vsyncadd [#allocation6], %s26
      %s29 = sshll.u32 [#allocation5], 4
      %s30 = int_to_ptr.vmem [resolvable:$true] %s29
      %32 = dma.hbm_to_vmem [thread:$0]  %s1, 128, %s30, [#allocation6]
    $region9: #{conv1_1_block.1} parent=1 // pred_fallthru
      _
    // Predicated region
    $region10: #{conv1_1_block.1} parent=1 // pred_check
      _
    $region11: #{conv1_1_block.1} parent=1 // pred_check_branch
      %34 = sbr.rel (0) target = $region13
    $region12: #{conv1_1_block.1} parent=1 // pred_region
      %s36 = ssub.s32 128, 128
      %37 = vsyncadd [#allocation6], %s36
      %s39 = sshll.u32 [#allocation7], 4
      %s40 = int_to_ptr.vmem [resolvable:$true] %s39
      %42 = dma.hbm_to_vmem [thread:$0]  %s2, 128, %s40, [#allocation6]
    $region13: #{conv1_1_block.1} parent=1 // pred_fallthru
      _
    // Predicated region
    $region14: #{conv1_1_block.1} parent=1 // pred_check
      _
    $region15: #{conv1_1_block.1} parent=1 // pred_check_branch
      %44 = sbr.rel (0) target = $region17
    $region16: #{conv1_1_block.1} parent=1 // pred_region
      %45 = dma.done [#allocation3], 256
    $region17: #{conv1_1_block.1} parent=1 // pred_fallthru
      _
    // Predicated region
    $region18: #{conv1_1_block.1} parent=1 // pred_check
      _
    $region19: #{conv1_1_block.1} parent=1 // pred_check_branch
      %47 = sbr.rel (0) target = $region21
    $region20: #{conv1_1_block.1} parent=1 // pred_region
      %48 = dma.done [#allocation6], 128
    $region21: #{conv1_1_block.1} parent=1 // pred_fallthru
      _
    // Predicated region
    $region22: #{conv1_1_block.1} parent=1 // pred_check
      _
    $region23: #{conv1_1_block.1} parent=1 // pred_check_branch
      %50 = sbr.rel (0) target = $region25
    $region24: #{conv1_1_block.1} parent=1 // pred_region
      %51 = dma.done [#allocation6], 128
    $region25: #{conv1_1_block.1} parent=1 // pred_fallthru
      _
    %v52 = vld [vmem:[#allocation5] sm:$0xff]
    %v53 = vld [vmem:[#allocation7] sm:$0xff]
    %v54 = vld [vmem:[#allocation2] sm:$0xff]
    %56 = vset.pattern.permute.xlu0 0
    %57 = vperm.xlu0 %56, %v53
    %v58 = vpop.permute.xlu0 %57
    %v61 = vcombine.high %v54, %v54
    %vm62 = vcmask 31744
    %v64 = vsel %vm62, %v52, 0
    %vm66 = vcmask 1043456
    %v67 = vsel %vm66, %v54, 0
    %v69 = vsel %vm66, %v61, 0
    %71 = vmatprep.subr.mxu0 %v69
    %72 = vmatpush1.msra.mxu0 %v67
    %73 = vmatprep.subr.mxu0 0.0
    %74 = vmatpush1.msra.mxu0 0.0
    %75 = vmatprep.subr.mxu0 0.0
    %76 = vmatpush1.msra.mxu0 0.0
    %77 = vmatprep.subr.mxu0 0.0
    %78 = vmatpush1.msra.mxu0 0.0
    %79 = vmatprep.subr.mxu0 0.0
    %80 = vmatpush1.msra.mxu0 0.0
    %81 = vmatprep.subr.mxu0 0.0
    %82 = vmatpush1.msra.mxu0 0.0
    %83 = vmatprep.subr.mxu0 0.0
    %84 = vmatpush1.msra.mxu0 0.0
    %85 = vmatprep.subr.mxu0 0.0
    %86 = vmatpush1.msra.mxu0 0.0
    %87 = vmatprep.subr.mxu0 0.0
    %88 = vmatpush1.msra.mxu0 0.0
    %89 = vmatprep.subr.mxu0 0.0
    %90 = vmatpush1.msra.mxu0 0.0
    %91 = vmatprep.subr.mxu0 0.0
    %92 = vmatpush1.msra.mxu0 0.0
    %93 = vmatprep.subr.mxu0 0.0
    %94 = vmatpush1.msra.mxu0 0.0
    %95 = vmatprep.subr.mxu0 0.0
    %96 = vmatpush1.msra.mxu0 0.0
    %97 = vmatprep.subr.mxu0 0.0
    %98 = vmatpush1.msra.mxu0 0.0
    %99 = vmatprep.subr.mxu0 0.0
    %100 = vmatpush1.msra.mxu0 0.0
    %101 = vmatprep.subr.mxu0 0.0
    %102 = vmatpush1.msra.mxu0 0.0
    %103 = vmatprep.subr.mxu0 0.0
    %104 = vmatpush1.msra.mxu0 0.0
    %105 = vmatprep.subr.mxu0 0.0
    %106 = vmatpush1.msra.mxu0 0.0
    %107 = vmatprep.subr.mxu0 0.0
    %108 = vmatpush1.msra.mxu0 0.0
    %109 = vmatprep.subr.mxu0 0.0
    %110 = vmatpush1.msra.mxu0 0.0
    %111 = vmatprep.subr.mxu0 0.0
    %112 = vmatpush1.msra.mxu0 0.0
    %113 = vmatprep.subr.mxu0 0.0
    %114 = vmatpush1.msra.mxu0 0.0
    %115 = vmatprep.subr.mxu0 0.0
    %116 = vmatpush1.msra.mxu0 0.0
    %117 = vmatprep.subr.mxu0 0.0
    %118 = vmatpush1.msra.mxu0 0.0
    %119 = vmatprep.subr.mxu0 0.0
    %120 = vmatpush1.msra.mxu0 0.0
    %121 = vmatprep.subr.mxu0 0.0
    %122 = vmatpush1.msra.mxu0 0.0
    %123 = vmatprep.subr.mxu0 0.0
    %124 = vmatpush1.msra.mxu0 0.0
    %125 = vmatprep.subr.mxu0 0.0
    %126 = vmatpush1.msra.mxu0 0.0
    %127 = vmatprep.subr.mxu0 0.0
    %128 = vmatpush1.msra.mxu0 0.0
    %129 = vmatprep.subr.mxu0 0.0
    %130 = vmatpush1.msra.mxu0 0.0
    %131 = vmatprep.subr.mxu0 0.0
    %132 = vmatpush1.msra.mxu0 0.0
    %133 = vmatprep.subr.mxu0 0.0
    %134 = vmatpush1.msra.mxu0 0.0
    %135 = vmatprep.mubr.f32.mxu0 0.0
    %136 = vmatmul.mubr.f32.gmra.mrb[0].mxu0 %v64
    %v137 = vpop.f32.mrb[0].mxu0
    %v138 = vadd.f32 %v58, %v137
    %v139 = vpop.f32.mrb[0].mxu0
    %v140 = vadd.f32 %v58, %v139
    %141 = vdwg.mxu0
    %v142 = vmax.f32 %v138, 0.0
    %v143 = vmax.f32 %v140, 0.0
    %v144 = vmin.f32 %v142, 6.0
    %v145 = vmin.f32 %v143, 6.0
    %146 = vst [vmem:[#allocation8] sm:$0xff] %v144
    %147 = vst [vmem:[#allocation8 + $0x8] sm:$0xff] %v145
    %s148 = scalar_lea.vmem [#allocation2], 8
    %v149 = vld [vmem:[%s148] sm:$0xff]
    %v151 = vcombine.high %v149, %v149
    %v152 = vsel %vm66, %v149, 0
    %v154 = vsel %vm66, %v151, 0
    %156 = vmatprep.subr.mxu0 %v154
    %157 = vmatpush1.msra.mxu0 %v152
    %158 = vmatprep.subr.mxu0 0.0
    %159 = vmatpush1.msra.mxu0 0.0
    %160 = vmatprep.subr.mxu0 0.0
    %161 = vmatpush1.msra.mxu0 0.0
    %162 = vmatprep.subr.mxu0 0.0
    %163 = vmatpush1.msra.mxu0 0.0
    %164 = vmatprep.subr.mxu0 0.0
    %165 = vmatpush1.msra.mxu0 0.0
    %166 = vmatprep.subr.mxu0 0.0
    %167 = vmatpush1.msra.mxu0 0.0
    %168 = vmatprep.subr.mxu0 0.0
    %169 = vmatpush1.msra.mxu0 0.0
    %170 = vmatprep.subr.mxu0 0.0
    %171 = vmatpush1.msra.mxu0 0.0
    %172 = vmatprep.subr.mxu0 0.0
    %173 = vmatpush1.msra.mxu0 0.0
    %174 = vmatprep.subr.mxu0 0.0
    %175 = vmatpush1.msra.mxu0 0.0
    %176 = vmatprep.subr.mxu0 0.0
    %177 = vmatpush1.msra.mxu0 0.0
    %178 = vmatprep.subr.mxu0 0.0
    %179 = vmatpush1.msra.mxu0 0.0
    %180 = vmatprep.subr.mxu0 0.0
    %181 = vmatpush1.msra.mxu0 0.0
    %182 = vmatprep.subr.mxu0 0.0
    %183 = vmatpush1.msra.mxu0 0.0
    %184 = vmatprep.subr.mxu0 0.0
    %185 = vmatpush1.msra.mxu0 0.0
    %186 = vmatprep.subr.mxu0 0.0
    %187 = vmatpush1.msra.mxu0 0.0
    %188 = vmatprep.subr.mxu0 0.0
    %189 = vmatpush1.msra.mxu0 0.0
    %190 = vmatprep.subr.mxu0 0.0
    %191 = vmatpush1.msra.mxu0 0.0
    %192 = vmatprep.subr.mxu0 0.0
    %193 = vmatpush1.msra.mxu0 0.0
    %194 = vmatprep.subr.mxu0 0.0
    %195 = vmatpush1.msra.mxu0 0.0
    %196 = vmatprep.subr.mxu0 0.0
    %197 = vmatpush1.msra.mxu0 0.0
    %198 = vmatprep.subr.mxu0 0.0
    %199 = vmatpush1.msra.mxu0 0.0
    %200 = vmatprep.subr.mxu0 0.0
    %201 = vmatpush1.msra.mxu0 0.0
    %202 = vmatprep.subr.mxu0 0.0
    %203 = vmatpush1.msra.mxu0 0.0
    %204 = vmatprep.subr.mxu0 0.0
    %205 = vmatpush1.msra.mxu0 0.0
    %206 = vmatprep.subr.mxu0 0.0
    %207 = vmatpush1.msra.mxu0 0.0
    %208 = vmatprep.subr.mxu0 0.0
    %209 = vmatpush1.msra.mxu0 0.0
    %210 = vmatprep.subr.mxu0 0.0
    %211 = vmatpush1.msra.mxu0 0.0
    %212 = vmatprep.subr.mxu0 0.0
    %213 = vmatpush1.msra.mxu0 0.0
    %214 = vmatprep.subr.mxu0 0.0
    %215 = vmatpush1.msra.mxu0 0.0
    %216 = vmatprep.subr.mxu0 0.0
    %217 = vmatpush1.msra.mxu0 0.0
    %218 = vmatprep.subr.mxu0 0.0
    %219 = vmatpush1.msra.mxu0 0.0
    %220 = vmatprep.mubr.f32.mxu0 0.0
    %221 = vmatmul.mubr.f32.gmra.mrb[0].mxu0 %v64
    %v222 = vpop.f32.mrb[0].mxu0
    %v223 = vadd.f32 %v58, %v222
    %v224 = vpop.f32.mrb[0].mxu0
    %v225 = vadd.f32 %v58, %v224
    %226 = vdwg.mxu0
    %v227 = vmax.f32 %v223, 0.0
    %v228 = vmax.f32 %v225, 0.0
    %v229 = vmin.f32 %v227, 6.0
    %v230 = vmin.f32 %v228, 6.0
    %s231 = scalar_lea.vmem [#allocation8], 16
    %232 = vst [vmem:[%s231] sm:$0xff] %v229
    %233 = vst [vmem:[%s231 + $0x8] sm:$0xff] %v230
    // Predicated region
    $region26: #{conv1_1_block.1} parent=1 // pred_check
      _
    $region27: #{conv1_1_block.1} parent=1 // pred_check_branch
      %235 = sbr.rel (0) target = $region29
    $region28: #{conv1_1_block.1} parent=1 // pred_region
      %s237 = ssub.s32 512, 512
      %238 = vsyncadd [#allocation4], %s237
      %s239 = sshll.u32 [#allocation8], 4
      %s240 = int_to_ptr.vmem [resolvable:$true] %s239
      %245 = dma.vmem_to_hbm [thread:$0]  %s240, 512, %s3, [#allocation4], 256, 256, 16
    $region29: #{conv1_1_block.1} parent=1 // pred_fallthru
      _
    // Predicated region
    $region30: #{conv1_1_block.1} parent=1 // pred_check
      _
    $region31: #{conv1_1_block.1} parent=1 // pred_check_branch
      %247 = sbr.rel (0) target = $region33
    $region32: #{conv1_1_block.1} parent=1 // pred_region
      %248 = dma.done [#allocation4], 512
    $region33: #{conv1_1_block.1} parent=1 // pred_fallthru
      _
    %249 = vsyncpa [#allocation3], 1
    %250 = vsyncpa [#allocation6], 1
    %251 = vsyncpa [#allocation4], 1

</llo_original>
